<compile_context>
chip_gen: v6e
topology: v6e:2x2x1
jax: 0.10.0
libtpu: 0.0.40
codegen_flags: <defaults>
</compile_context>

<pallas_src>
import jax
import jax.numpy as jnp
from jax.experimental import pallas as pl
from jax.experimental.pallas import tpu as pltpu

_LANE = 128
_MAX_TILE_ROWS = 2048  # (3, 2048, 128) f32 block = 3 MiB; 2x-buffered ~6 MiB


def _round_up(x, m):
    return -(-x // m) * m


def _choose_tiling(rows, max_tile_rows, sub_mult, batch):
    """Pick (tile_rows, n_tiles) for the spatial-row axis."""
    n = pl.cdiv(rows, max_tile_rows)          # min tiles respecting VMEM cap
    if batch * n < 2 and rows >= 2 * sub_mult:
        n = 2                                  # give v7x's 2nd TensorCore work
    tile_rows = _round_up(pl.cdiv(rows, n), sub_mult)   # balanced + aligned
    if tile_rows >= rows:
        return rows, 1                         # single full-extent tile
    return tile_rows, pl.cdiv(rows, tile_rows)


def _make_kernel(hw, tile_rows, need_mask):
    def kernel(mean_ref, x_ref, o_ref):
        # mean_ref: (3, 1, 1) f32   per-channel spatial means of this batch elem
        # x_ref:    (3, T, 128)     native-dtype dense spatial tile
        # o_ref:    (1, 1)  f32     partial sum of k over this tile
        x = x_ref[...].astype(jnp.float32)
        m = mean_ref[...]
        dr = x[0] - m[0]
        dg = x[1] - m[1]
        db = x[2] - m[2]
        ss = dr * dr + dg * dg + db * db                  # (T, 128)
        if need_mask:
            # Mask lane padding and the ragged last tile; masking before the
            # sqrt also kills any garbage in the unspecified tail of a partial
            # block (so no NaN can leak into the partial sum).
            si = pl.program_id(1)
            row = jax.lax.broadcasted_iota(jnp.int32, (tile_rows, _LANE), 0)
            lane = jax.lax.broadcasted_iota(jnp.int32, (tile_rows, _LANE), 1)
            elem = (si * tile_rows + row) * _LANE + lane
            ss = jnp.where(elem < hw, ss, 0.0)
        k = jnp.sqrt(ss)
        o_ref[...] = jnp.sum(k, keepdims=True)            # (1, 1)
    return kernel


def sa_loss(x, *, max_tile_rows=_MAX_TILE_ROWS):
    """x: (B, 3, H, W) array (any float dtype). Returns scalar float32 loss."""
    b, c, h, w = x.shape
    assert c == 3, "Sa_Loss expects exactly 3 channels (r, g, b)"
    hw = h * w
    rows = pl.cdiv(hw, _LANE)

    # One HBM-bound pass for the means, accumulated in f32 on the native dtype.
    mean = jnp.mean(x, axis=(2, 3), dtype=jnp.float32).reshape(b, c, 1, 1)

    # Lane-dense repack (B, 3, rows, 128); zero-pad only for the 128-lane
    # reshape (padded / out-of-range pixels are masked inside the kernel).
    xr = x.reshape(b, c, hw)
    hw_pad = rows * _LANE
    if hw_pad != hw:
        xr = jnp.pad(xr, ((0, 0), (0, 0), (0, hw_pad - hw)))
    xr = xr.reshape(b, c, rows, _LANE)

    itemsize = jnp.dtype(x.dtype).itemsize
    sub_mult = max(8, 32 // max(itemsize, 1))   # f32: 8, bf16: 16, int8: 32
    tile_rows, n_tiles = _choose_tiling(rows, max_tile_rows, sub_mult, b)
    need_mask = (hw_pad != hw) or (tile_rows * n_tiles != rows)

    partial = pl.pallas_call(
        _make_kernel(hw, tile_rows, need_mask),
        out_shape=jax.ShapeDtypeStruct((b, n_tiles, 1, 1), jnp.float32),
        grid=(b, n_tiles),
        in_specs=[
            # tiny per-batch means: (3, 1, 1) in VMEM
            pl.BlockSpec((None, c, 1, 1), lambda bi, si: (bi, 0, 0, 0)),
            # batch dim squeezed; kernel sees a dense (3, tile_rows, 128)
            pl.BlockSpec((None, c, tile_rows, _LANE),
                         lambda bi, si: (bi, 0, si, 0)),
        ],
        out_specs=pl.BlockSpec((None, None, 1, 1),
                               lambda bi, si: (bi, si, 0, 0)),
        compiler_params=pltpu.CompilerParams(
            # no carried state -> both axes parallel (v7x: 2 TensorCores)
            dimension_semantics=("parallel", "parallel"),
        ),
    )(mean, xr)

    return jnp.sum(partial) / jnp.float32(b * hw)


def _sa_loss_ref(x):
    # pure-JAX reference mirroring the PyTorch module (in f32)
    xf = x.astype(jnp.float32)
    mean_rgb = jnp.mean(xf, axis=(2, 3), keepdims=True)
    d = xf - mean_rgb
    k = jnp.sqrt(jnp.sum(d * d, axis=1, keepdims=True))
    return jnp.mean(k)


if __name__ == "__main__":
    key = jax.random.PRNGKey(0)

    # Base case: hw is a multiple of 128, single full-extent tile per batch.
    x = jax.random.uniform(key, (2, 3, 16, 16), dtype=jnp.float32)
    loss = sa_loss(x)
    jax.block_until_ready(loss)
    ref = _sa_loss_ref(x)
    assert jnp.allclose(loss, ref, rtol=2e-5, atol=1e-6), (loss, ref)

    # Odd spatial size: exercises the lane-pad + in-kernel mask path.
    x2 = jax.random.uniform(jax.random.PRNGKey(1), (2, 3, 17, 19),
                            dtype=jnp.float32)
    loss2 = sa_loss(x2)
    jax.block_until_ready(loss2)
    ref2 = _sa_loss_ref(x2)
    assert jnp.allclose(loss2, ref2, rtol=2e-5, atol=1e-6), (loss2, ref2)

    # Multi-tile grid (forced small tile): tiling + ragged last tile + mask.
    x3 = jax.random.uniform(jax.random.PRNGKey(2), (1, 3, 33, 33),
                            dtype=jnp.float32)
    loss3 = sa_loss(x3, max_tile_rows=8)
    jax.block_until_ready(loss3)
    ref3 = _sa_loss_ref(x3)
    assert jnp.allclose(loss3, ref3, rtol=2e-5, atol=1e-6), (loss3, ref3)

    # bf16 input: native-dtype streaming with in-kernel f32 cast, plus the
    # batch==1 two-tile split (v7x two-core path).
    x4 = jax.random.uniform(jax.random.PRNGKey(3), (1, 3, 64, 64),
                            dtype=jnp.float32).astype(jnp.bfloat16)
    loss4 = sa_loss(x4)
    jax.block_until_ready(loss4)
    ref4 = _sa_loss_ref(x4)
    assert jnp.allclose(loss4, ref4, rtol=1e-4, atol=1e-5), (loss4, ref4)

    print("KERNEL_OK")
</pallas_src>

<mosaic_0001>
module attributes {stable_mosaic.version = 11 : i64} {
  func.func @kernel(%arg0: i32, %arg1: i32, %arg2: memref<1x3x1x1xf32, #tpu.memory_space<vmem>>, %arg3: memref<1x3x2x128xf32, #tpu.memory_space<vmem>>, %arg4: memref<1x1x1x1xf32, #tpu.memory_space<vmem>>) attributes {dimension_semantics = [#tpu.dimension_semantics<parallel>, #tpu.dimension_semantics<parallel>], iteration_bounds = array<i64: 2, 1>, scalar_prefetch = 0 : i64, scratch_operands = 0 : i64, tpu.core_type = #tpu.core_type<tc>, window_params = [{transform_indices = @transform_0, window_bounds = array<i64: 1, 3, 1, 1>}, {transform_indices = @transform_1, window_bounds = array<i64: 1, 3, 2, 128>}, {transform_indices = @transform_2, window_bounds = array<i64: 1, 1, 1, 1>}]} {
    %c0 = arith.constant 0 : index
    %c0_0 = arith.constant 0 : index
    %c0_1 = arith.constant 0 : index
    %c0_2 = arith.constant 0 : index
    %0 = vector.load %arg3[%c0, %c0_0, %c0_1, %c0_2] : memref<1x3x2x128xf32, #tpu.memory_space<vmem>>, vector<1x3x2x128xf32>
    %1 = vector.shape_cast %0 : vector<1x3x2x128xf32> to vector<3x2x128xf32>
    %c0_3 = arith.constant 0 : index
    %c0_4 = arith.constant 0 : index
    %c0_5 = arith.constant 0 : index
    %c0_6 = arith.constant 0 : index
    %2 = vector.load %arg2[%c0_3, %c0_4, %c0_5, %c0_6] : memref<1x3x1x1xf32, #tpu.memory_space<vmem>>, vector<1x3x1x1xf32>
    %3 = vector.shape_cast %2 : vector<1x3x1x1xf32> to vector<3x1x1xf32>
    %4 = vector.extract_strided_slice %1 {offsets = [0, 0, 0], sizes = [1, 2, 128], strides = [1, 1, 1]} : vector<3x2x128xf32> to vector<1x2x128xf32>
    %5 = vector.shape_cast %4 : vector<1x2x128xf32> to vector<2x128xf32>
    %6 = vector.extract_strided_slice %3 {offsets = [0, 0, 0], sizes = [1, 1, 1], strides = [1, 1, 1]} : vector<3x1x1xf32> to vector<1x1x1xf32>
    %7 = vector.shape_cast %6 : vector<1x1x1xf32> to vector<1x1xf32>
    %8 = vector.broadcast %7 : vector<1x1xf32> to vector<2x128xf32>
    %9 = arith.subf %5, %8 : vector<2x128xf32>
    %10 = vector.extract_strided_slice %1 {offsets = [1, 0, 0], sizes = [1, 2, 128], strides = [1, 1, 1]} : vector<3x2x128xf32> to vector<1x2x128xf32>
    %11 = vector.shape_cast %10 : vector<1x2x128xf32> to vector<2x128xf32>
    %12 = vector.extract_strided_slice %3 {offsets = [1, 0, 0], sizes = [1, 1, 1], strides = [1, 1, 1]} : vector<3x1x1xf32> to vector<1x1x1xf32>
    %13 = vector.shape_cast %12 : vector<1x1x1xf32> to vector<1x1xf32>
    %14 = vector.broadcast %13 : vector<1x1xf32> to vector<2x128xf32>
    %15 = arith.subf %11, %14 : vector<2x128xf32>
    %16 = vector.extract_strided_slice %1 {offsets = [2, 0, 0], sizes = [1, 2, 128], strides = [1, 1, 1]} : vector<3x2x128xf32> to vector<1x2x128xf32>
    %17 = vector.shape_cast %16 : vector<1x2x128xf32> to vector<2x128xf32>
    %18 = vector.extract_strided_slice %3 {offsets = [2, 0, 0], sizes = [1, 1, 1], strides = [1, 1, 1]} : vector<3x1x1xf32> to vector<1x1x1xf32>
    %19 = vector.shape_cast %18 : vector<1x1x1xf32> to vector<1x1xf32>
    %20 = vector.broadcast %19 : vector<1x1xf32> to vector<2x128xf32>
    %21 = arith.subf %17, %20 : vector<2x128xf32>
    %22 = arith.mulf %9, %9 : vector<2x128xf32>
    %23 = arith.mulf %15, %15 : vector<2x128xf32>
    %24 = arith.addf %22, %23 : vector<2x128xf32>
    %25 = arith.mulf %21, %21 : vector<2x128xf32>
    %26 = arith.addf %24, %25 : vector<2x128xf32>
    %27 = math.sqrt %26 : vector<2x128xf32>
    %28 = vector.shape_cast %27 : vector<2x128xf32> to vector<1x2x128xf32>
    %cst = arith.constant dense<0.000000e+00> : vector<1xf32>
    %29 = vector.multi_reduction <add>, %28, %cst [1, 2] : vector<1x2x128xf32> to vector<1xf32>
    %30 = vector.shape_cast %29 : vector<1xf32> to vector<1x1x1xf32>
    %31 = vector.extract %30[0, 0, 0] : f32 from vector<1x1x1xf32>
    %32 = vector.broadcast %31 : f32 to vector<1x1xf32>
    %c0_7 = arith.constant 0 : index
    %c0_8 = arith.constant 0 : index
    %c0_9 = arith.constant 0 : index
    %c0_10 = arith.constant 0 : index
    %33 = vector.load %arg4[%c0_7, %c0_8, %c0_9, %c0_10] : memref<1x1x1x1xf32, #tpu.memory_space<vmem>>, vector<1x1x1x1xf32>
    %34 = vector.shape_cast %33 : vector<1x1x1x1xf32> to vector<1x1xf32>
    %35 = vector.shape_cast %32 : vector<1x1xf32> to vector<1x1x1x1xf32>
    tpu.vector_store %arg4[%c0_7, %c0_8, %c0_9, %c0_10], %35 {strides = array<i32>} : memref<1x1x1x1xf32, #tpu.memory_space<vmem>>, vector<1x1x1x1xf32>,
    return
  }
  func.func @transform_0(%arg0: i32, %arg1: i32) -> (i32, i32, i32, i32) {
    %c0_i32 = arith.constant 0 : i32
    %c0_i32_0 = arith.constant 0 : i32
    %c0_i32_1 = arith.constant 0 : i32
    %c0_i32_2 = arith.constant 0 : i32
    return %arg0, %c0_i32, %c0_i32_0, %c0_i32_1 : i32, i32, i32, i32
  }
  func.func @transform_1(%arg0: i32, %arg1: i32) -> (i32, i32, i32, i32) {
    %c0_i32 = arith.constant 0 : i32
    %c0_i32_0 = arith.constant 0 : i32
    %c0_i32_1 = arith.constant 0 : i32
    return %arg0, %c0_i32, %arg1, %c0_i32_0 : i32, i32, i32, i32
  }
  func.func @transform_2(%arg0: i32, %arg1: i32) -> (i32, i32, i32, i32) {
    %c0_i32 = arith.constant 0 : i32
    %c0_i32_0 = arith.constant 0 : i32
    %c0_i32_1 = arith.constant 0 : i32
    return %arg0, %arg1, %c0_i32, %c0_i32_0 : i32, i32, i32, i32
  }
}

</mosaic_0001>

<llo_original>
// kernel: tpu_custom_call.1
$region0: #{tpu_custom_call.1}
  #allocation0 [shape = 'u32[]', space=smem, size = 0x4, offset = 0x4, fixed_abs, tag = 'smem constant byte address 0x4 - core index']
  #allocation1 [shape = 'u32[144,128]{1,0:T(1,128)}', space=vmem, size = 0x12000, scoped, tag = 'internal scratch']
  %s0 = inlined_call_operand.vmem [shape: f32[2,3,1,1], index: 0, kind: input, shape index: {}]
  %s1 = inlined_call_operand.hbm [shape: f32[2,3,2,128], index: 1, kind: input, shape index: {}]
  %s2 = inlined_call_operand.vmem [shape: f32[2,1,1,1], index: 2, kind: output, shape index: {}]
  %s3 = sld [smem:[#allocation0]]
  $region45: #{tpu_custom_call.1} parent=0
    _
  %s5 = ssub.s32 1, %s3
  %s6 = scalar_select 0, %s5, %s3
  $region1: #{tpu_custom_call.1} parent=0
    #allocation2 [shape = 'u8[6144]{0}', space=vmem, size = 0x1800, scoped, tag = 'input window, operand 1']
    #allocation3 [shape = 's32[2]{0}', space=sflag, size = 0x8, scoped, tag = 'scoped memory for tpu_custom_call.1']
    %7 = vsyncpa [#allocation3], 0
    %s8 = scalar_lea.sflag [#allocation3], 1
    %9 = vsyncpa %s8, 0
    loop: start=0, step=1, limit=4
    $region2: #{tpu_custom_call.1} parent=1 // loop_pre_header
      _
    $region3: #{tpu_custom_call.1} parent=1 // loop_header
      %s11 = sphi 0, %s15
      %p12 = scmp.ge.s32.totalorder %s11, 4
      %s18 = sphi 0, %s30
      %s19 = sphi 0, %s26
      %s20 = sphi 0, %s18
      %s21 = sphi 0, %s19
      %s22 = sphi 0, %s20
      %s23 = sphi 0, %s21
      %s33 = sphi 0, %s35
      %s36 = sphi 0, %s33
      %s37 = sphi 0, %s36
      %s53 = sphi 0, %s37
      %s61 = sphi 0, %s63
      %s64 = sphi 0, %s61
      %s65 = sphi 0, %s64
      %s81 = sphi 0, %s65
      %s89 = sphi 0, %s91
      %s92 = sphi 0, %s89
      %s93 = sphi 0, %s92
      %s109 = sphi 0, %s93
    $region4: #{tpu_custom_call.1} parent=1 // loop_header_branch
      %14 = sbr.rel (%p12) target = $region8
    $region5: #{tpu_custom_call.1} parent=1 // loop_body
      %s16 = ssub.s32 %s11, 1
      %s17 = ssub.s32 %s11, 2
      %s24 = sadd.s32 1, %s19
      %p25 = scmp.ge.s32.totalorder %s24, 1
      %s26 = scalar_select %p25, 0, %s24
      %s27 = sadd.s32 1, %s18
      %s28 = scalar_select %p25, %s27, %s18
      %p29 = scmp.ge.s32.totalorder %s28, 2
      %s30 = scalar_select %p29, 0, %s28
      %s31 = ssub.s32 %s18, %s30
      %p32 = scmp.eq.s32.totalorder %s31, 0
      %s34 = sadd.s32 %s33, 1
      %s35 = scalar_select %p32, %s33, %s34
      %p38 = pneg %p32
      %p39 = scmp.eq.s32.totalorder %s11, 1
      %p40 = por %p38, %p39
      %p41 = scmp.ne.s32.totalorder %s33, %s36
      %p42 = scmp.eq.s32.totalorder %s11, 0
      %p43 = por %p41, %p42
      %p44 = scmp.ne.s32.totalorder %s33, %s36
      %p45 = scmp.eq.s32.totalorder %s16, 1
      %p46 = por %p44, %p45
      %p47 = scmp.ne.s32.totalorder %s36, %s37
      %p48 = scmp.eq.s32.totalorder %s16, 0
      %p49 = por %p47, %p48
      %p50 = scmp.ne.s32.totalorder %s36, %s37
      %p51 = scmp.eq.s32.totalorder %s17, 1
      %p52 = por %p50, %p51
      %p54 = scmp.ne.s32.totalorder %s37, %s53
      %p55 = scmp.eq.s32.totalorder %s17, 0
      %p56 = por %p54, %p55
      %s57 = ssub.s32 %s18, %s30
      %s58 = ssub.s32 %s19, %s26
      %s59 = sor.u32 %s57, %s58
      %p60 = scmp.eq.s32.totalorder %s59, 0
      %s62 = sadd.s32 %s61, 1
      %s63 = scalar_select %p60, %s61, %s62
      %p66 = pneg %p60
      %p67 = scmp.eq.s32.totalorder %s11, 1
      %p68 = por %p66, %p67
      %p69 = scmp.ne.s32.totalorder %s61, %s64
      %p70 = scmp.eq.s32.totalorder %s11, 0
      %p71 = por %p69, %p70
      %p72 = scmp.ne.s32.totalorder %s61, %s64
      %p73 = scmp.eq.s32.totalorder %s16, 1
      %p74 = por %p72, %p73
      %p75 = scmp.ne.s32.totalorder %s64, %s65
      %p76 = scmp.eq.s32.totalorder %s16, 0
      %p77 = por %p75, %p76
      %p78 = scmp.ne.s32.totalorder %s64, %s65
      %p79 = scmp.eq.s32.totalorder %s17, 1
      %p80 = por %p78, %p79
      %p82 = scmp.ne.s32.totalorder %s65, %s81
      %p83 = scmp.eq.s32.totalorder %s17, 0
      %p84 = por %p82, %p83
      %s85 = ssub.s32 %s18, %s30
      %s86 = ssub.s32 %s19, %s26
      %s87 = sor.u32 %s85, %s86
      %p88 = scmp.eq.s32.totalorder %s87, 0
      %s90 = sadd.s32 %s89, 1
      %s91 = scalar_select %p88, %s89, %s90
      %p94 = pneg %p88
      %p95 = scmp.eq.s32.totalorder %s11, 1
      %p96 = por %p94, %p95
      %p97 = scmp.ne.s32.totalorder %s89, %s92
      %p98 = scmp.eq.s32.totalorder %s11, 0
      %p99 = por %p97, %p98
      %p100 = scmp.ne.s32.totalorder %s89, %s92
      %p101 = scmp.eq.s32.totalorder %s16, 1
      %p102 = por %p100, %p101
      %p103 = scmp.ne.s32.totalorder %s92, %s93
      %p104 = scmp.eq.s32.totalorder %s16, 0
      %p105 = por %p103, %p104
      %p106 = scmp.ne.s32.totalorder %s92, %s93
      %p107 = scmp.eq.s32.totalorder %s17, 1
      %p108 = por %p106, %p107
      %p110 = scmp.ne.s32.totalorder %s93, %s109
      %p111 = scmp.eq.s32.totalorder %s17, 0
      %p112 = por %p110, %p111
      %p113 = scmp.le.s32.totalorder 1, %s11
      %p114 = scmp.lt.s32.totalorder %s11, 3
      %p115 = pnand %p113, %p114
      %p116 = pneg %p115
      // Predicated region
      $region9: #{tpu_custom_call.1} parent=5 // pred_check
        _
      $region10: #{tpu_custom_call.1} parent=5 // pred_check_branch
        %118 = sbr.rel (%p115) target = $region12
      $region11: #{tpu_custom_call.1} parent=5 // pred_region
        %s119 = ssub.s32 %s11, 1
      $region12: #{tpu_custom_call.1} parent=5 // pred_fallthru
        _
      %p120 = scmp.lt.s32.totalorder %s11, 2
      // Predicated region
      $region13: #{tpu_custom_call.1} parent=5 // pred_check
        %p121 = pneg %p120
      $region14: #{tpu_custom_call.1} parent=5 // pred_check_branch
        %123 = sbr.rel (%p121) target = $region16
      $region15: #{tpu_custom_call.1} parent=5 // pred_region
        // Predicated region
        $region17: #{tpu_custom_call.1} parent=15 // pred_check
          %p124 = pneg %p43
        $region18: #{tpu_custom_call.1} parent=15 // pred_check_branch
          %126 = sbr.rel (%p124) target = $region20
        $region19: #{tpu_custom_call.1} parent=15 // pred_region
          %p127 = scmp.lt.s32.totalorder %s18, 1
          %s128 = scalar_select %p127, %s18, 1
          %s129 = smul.addr %s128, 3
          %s130 = scalar_lea.vmem %s0, %s129
        $region20: #{tpu_custom_call.1} parent=15 // pred_fallthru
          _
        // Predicated region
        $region21: #{tpu_custom_call.1} parent=15 // pred_check
          %p131 = pneg %p71
        $region22: #{tpu_custom_call.1} parent=15 // pred_check_branch
          %133 = sbr.rel (%p131) target = $region24
        $region23: #{tpu_custom_call.1} parent=15 // pred_region
          %s134 = sand.u32 %s61, 1
          %s135 = scalar_lea.sflag [#allocation3], %s134
          %s136 = sand.u32 %s61, 1
          %s137 = smul.addr %s136, 6
          %s138 = scalar_lea.vmem [#allocation2], %s137
          %s140 = ssub.s32 96, 96
          %141 = vsyncadd %s135, %s140
          %s142 = smul.addr %s18, 3
          %s143 = sadd.s32 %s19, %s142
          %s144 = smul.addr %s143, 32
          %s145 = scalar_lea.hbm %s1, %s144
          %s146 = sshll.u32 %s138, 4
          %s147 = int_to_ptr.vmem [resolvable:$true] %s146
          %152 = dma.hbm_to_vmem [thread:$0]  %s145, 96, %s147, %s135, 32, 32, 2
        $region24: #{tpu_custom_call.1} parent=15 // pred_fallthru
          _
      $region16: #{tpu_custom_call.1} parent=5 // pred_fallthru
        _
      %p153 = scmp.le.s32.totalorder 1, %s11
      %p154 = scmp.lt.s32.totalorder %s11, 3
      %p155 = pnand %p153, %p154
      %p156 = pneg %p155
      // Predicated region
      $region25: #{tpu_custom_call.1} parent=5 // pred_check
        _
      $region26: #{tpu_custom_call.1} parent=5 // pred_check_branch
        %158 = sbr.rel (%p155) target = $region28
      $region27: #{tpu_custom_call.1} parent=5 // pred_region
        %s159 = ssub.s32 %s11, 1
        %s160 = sand.u32 %s64, 1
        %s161 = scalar_lea.sflag [#allocation3], %s160
        %s162 = sand.u32 %s64, 1
        %s163 = smul.addr %s162, 6
        %s164 = scalar_lea.vmem [#allocation2], %s163
        // Predicated region
        $region29: #{tpu_custom_call.1} parent=27 // pred_check
          %p165 = pneg %p77
        $region30: #{tpu_custom_call.1} parent=27 // pred_check_branch
          %167 = sbr.rel (%p165) target = $region32
        $region31: #{tpu_custom_call.1} parent=27 // pred_region
          %168 = dma.done %s161, 96
        $region32: #{tpu_custom_call.1} parent=27 // pred_fallthru
          _
        %p169 = scmp.lt.s32.totalorder %s20, 1
        %s170 = scalar_select %p169, %s20, 1
        %s171 = smul.addr %s170, 3
        %s172 = scalar_lea.vmem %s0, %s171
        %p173 = pneg %p49
        %p174 = pneg %p46
        %s175 = sand.u32 %s64, 1
        %s176 = scalar_lea.sflag [#allocation3], %s175
        %s177 = sand.u32 %s64, 1
        %s178 = smul.addr %s177, 6
        %s179 = scalar_lea.vmem [#allocation2], %s178
        %p180 = pneg %p77
        %p181 = pneg %p74
        %p182 = pneg %p105
        %p183 = pneg %p102
        %p184 = scmp.lt.s32.totalorder %s20, 1
        %s185 = scalar_select %p184, %s20, 1
        %p186 = scmp.lt.s32.totalorder %s21, 0
        %s187 = scalar_select %p186, %s21, 0
        %s188 = sadd.s32 %s187, %s185
        %s189 = scalar_lea.vmem %s2, %s188
        %p190 = scmp.lt.s32.totalorder %s20, 1
        %s191 = scalar_select %p190, %s20, 1
        %s192 = smul.addr %s191, 3
        %s193 = scalar_lea.vmem %s0, %s192
        %p194 = scmp.lt.s32.totalorder %s20, 1
        %s195 = scalar_select %p194, %s20, 1
        %p196 = scmp.lt.s32.totalorder %s21, 0
        %s197 = scalar_select %p196, %s21, 0
        %s198 = sadd.s32 %s197, %s195
        %s199 = scalar_lea.vmem %s2, %s198
        %v200 = vld [vmem:[%s164] sm:$0x3]
        %v201 = vld [vmem:[%s164 + $0x2] sm:$0x3]
        %v202 = vld [vmem:[%s164 + $0x4] sm:$0x3]
        %v203 = vld [vmem:[%s193] sm:$0x1]
        %v204 = vld [vmem:[%s193 + $0x1] sm:$0x1]
        %v205 = vld [vmem:[%s193 + $0x2] sm:$0x1]
        %v207 = vlaneseq
        %v208 = vshrl.u32 %v207, 7
        %v209 = vsub.s32 0, %v208
        %v210 = vrot.slane %v203, %v209
        %211 = vset.pattern.permute.xlu0 0
        %212 = vperm.xlu0 %211, %v210
        %v213 = vpop.permute.xlu0 %212
        %v215 = vsub.f32 %v200, %v213
        %v217 = vlaneseq
        %v218 = vshrl.u32 %v217, 7
        %v219 = vsub.s32 0, %v218
        %v220 = vrot.slane %v204, %v219
        %221 = vset.pattern.permute.xlu0 0
        %222 = vperm.xlu0 %221, %v220
        %v223 = vpop.permute.xlu0 %222
        %v225 = vsub.f32 %v201, %v223
        %v227 = vlaneseq
        %v228 = vshrl.u32 %v227, 7
        %v229 = vsub.s32 0, %v228
        %v230 = vrot.slane %v205, %v229
        %231 = vset.pattern.permute.xlu0 0
        %232 = vperm.xlu0 %231, %v230
        %v233 = vpop.permute.xlu0 %232
        %v235 = vsub.f32 %v202, %v233
        %v236 = vmul.f32 %v215, %v215
        %v237 = vmul.f32 %v225, %v225
        %v238 = vadd.f32 %v236, %v237
        %v239 = vmul.f32 %v235, %v235
        %v240 = vadd.f32 %v238, %v239
        %v241 = vrsqrt.pop %v240
        %v242 = vmul.f32 %v240, %v241
        %vm243 = vcmp.eq.f32.partialorder %v240, inf
        %v244 = vsel %vm243, %v240, %v242
        %vm245 = vcmp.eq.f32.partialorder %v240, 0.0
        %v246 = vand.u32 %v240, 2147483648
        %v247 = vsel %vm245, %v246, %v244
        %vm248 = vcmask 1041408
        %v249 = vsel %vm248, %v247, 0.0
        %250 = vadd.xlane.f32.xlu0 %v249
        %v251 = vpop.xlane.xlu0 %250
        %v252 = vrot.slane %v251, 4
        %v253 = vadd.f32 %v251, %v252
        %v254 = vrot.slane %v253, 2
        %v255 = vadd.f32 %v253, %v254
        %v256 = vrot.slane %v255, 1
        %v257 = vadd.f32 %v255, %v256
        %s258 = vtos %v257
        %v259 = vstv %s258
        %vm260 = vcmask 0
        %261 = vst.msk [vmem:[%s199] sm:$0x1] %vm260, %v259
        %p262 = scmp.lt.s32.totalorder %s20, 1
        %s263 = scalar_select %p262, %s20, 1
        %p264 = scmp.lt.s32.totalorder %s21, 0
        %s265 = scalar_select %p264, %s21, 0
        %s266 = sadd.s32 %s265, %s263
        %s267 = scalar_lea.vmem %s2, %s266
        // Predicated region
        $region33: #{tpu_custom_call.1} parent=27 // pred_check
          %p268 = pneg %p102
        $region34: #{tpu_custom_call.1} parent=27 // pred_check_branch
          %270 = sbr.rel (%p268) target = $region36
        $region35: #{tpu_custom_call.1} parent=27 // pred_region
          _
        $region36: #{tpu_custom_call.1} parent=27 // pred_fallthru
          _
      $region28: #{tpu_custom_call.1} parent=5 // pred_fallthru
        _
      %p271 = scmp.le.s32.totalorder 2, %s11
      // Predicated region
      $region37: #{tpu_custom_call.1} parent=5 // pred_check
        %p272 = pneg %p271
      $region38: #{tpu_custom_call.1} parent=5 // pred_check_branch
        %274 = sbr.rel (%p272) target = $region40
      $region39: #{tpu_custom_call.1} parent=5 // pred_region
        %s275 = ssub.s32 %s11, 2
        // Predicated region
        $region41: #{tpu_custom_call.1} parent=39 // pred_check
          %p276 = pneg %p108
        $region42: #{tpu_custom_call.1} parent=39 // pred_check_branch
          %278 = sbr.rel (%p276) target = $region44
        $region43: #{tpu_custom_call.1} parent=39 // pred_region
          %p279 = scmp.lt.s32.totalorder %s22, 1
          %s280 = scalar_select %p279, %s22, 1
          %p281 = scmp.lt.s32.totalorder %s23, 0
          %s282 = scalar_select %p281, %s23, 0
          %s283 = sadd.s32 %s282, %s280
          %s284 = scalar_lea.vmem %s2, %s283
        $region44: #{tpu_custom_call.1} parent=39 // pred_fallthru
          _
      $region40: #{tpu_custom_call.1} parent=5 // pred_fallthru
        _
    $region6: #{tpu_custom_call.1} parent=1 // loop_footer
      %s15 = sadd.s32 1, %s11
    $region7: #{tpu_custom_call.1} parent=1 // loop_footer_branch
      %10 = sbr.rel target = $region3
    $region8: #{tpu_custom_call.1} parent=1 // loop_exit
      _
    %285 = vsyncpa [#allocation3], 1
    %s286 = scalar_lea.sflag [#allocation3], 1
    %287 = vsyncpa %s286, 1

</llo_original>
